<compile_context>
chip_gen: v6e
topology: v6e:2x2x1
jax: 0.10.0
libtpu: 0.0.40
codegen_flags: <defaults>
</compile_context>

<pallas_src>
import functools

import jax
import jax.numpy as jnp
from jax.experimental import pallas as pl
from jax.experimental.pallas import tpu as pltpu

PI = 3.1415927410125732


def _pos_mapping_kernel(x_ref, o_ref, *, L, split, pos_scale, heading_scale):
    x = x_ref[...]                       # (D, T): features on sublanes, rows on lanes
    d = x.shape[0]

    # Per-feature scale vectors, built once per grid step at (D, 1) and broadcast
    # across the lane (row) axis.
    fidx = jax.lax.broadcasted_iota(jnp.int32, (d, 1), 0)
    is_pos = fidx < split
    scale = jnp.where(is_pos, pos_scale, heading_scale).astype(x.dtype)
    inv_scale = jnp.where(is_pos, 1.0 / pos_scale, 1.0 / heading_scale).astype(x.dtype)

    # Identity slab.
    o_ref[0] = x.astype(o_ref.dtype)

    # Base angle; only two EUP transcendentals per element.
    theta = PI * (x * scale)
    s = jnp.sin(theta)
    c = jnp.cos(theta)
    for i in range(L):
        if i > 0:
            # Double-angle recurrence on the VPU:
            #   sin(2t) = 2*s*c ; cos(2t) = (c - s) * (c + s)
            s, c = 2.0 * (s * c), (c - s) * (c + s)
        o_ref[1 + 2 * i] = (s * inv_scale).astype(o_ref.dtype)
        o_ref[2 + 2 * i] = (c * inv_scale).astype(o_ref.dtype)


def positional_mapping(x, *, L=5, pos_scale=0.01, heading_scale=1.0,
                       row_tile=1024, out_dtype=None):
    """Pallas TPU positional mapping. x: (B, S, D). Returns (B, S, D*(2L+1))."""
    if L == 0:
        return x
    B, S, D = x.shape
    out_dtype = x.dtype if out_dtype is None else out_dtype
    n_parts = 2 * L + 1
    out_dim = D * n_parts
    split = (2 * D) // 3

    # Flatten (B, S) into a single row axis and put rows on the lane dimension.
    N = B * S
    assert row_tile % 128 == 0, "row_tile must be a multiple of 128 lanes"
    tile = min(row_tile, ((N + 127) // 128) * 128)
    grid_n = pl.cdiv(N, tile)
    padded_n = grid_n * tile

    xt = x.reshape(N, D).T                                   # (D, N)
    if padded_n != N:
        xt = jnp.pad(xt, ((0, 0), (0, padded_n - N)))        # zero rows -> sin(0)/cos(0), sliced away below

    kernel = functools.partial(
        _pos_mapping_kernel,
        L=L, split=split, pos_scale=pos_scale, heading_scale=heading_scale,
    )

    out_t = pl.pallas_call(
        kernel,
        out_shape=jax.ShapeDtypeStruct((n_parts, D, padded_n), out_dtype),
        grid=(grid_n,),
        in_specs=[pl.BlockSpec((D, tile), lambda n: (0, n))],
        out_specs=pl.BlockSpec((n_parts, D, tile), lambda n: (0, 0, n)),
        compiler_params=pltpu.CompilerParams(
            dimension_semantics=("parallel",),         # independent row tiles -> megacore
            vmem_limit_bytes=32 * 1024 * 1024,          # explicit; safe on v5e/v6e/v7x
        ),
    )(xt)

    # Back to the PyTorch contract: (B, S, [x, sin_0, cos_0, ..., sin_{L-1}, cos_{L-1}]).
    out = out_t[:, :, :N]                                    # (n_parts, D, N)
    out = jnp.transpose(out, (2, 0, 1)).reshape(B, S, out_dim)
    return out


def positional_mapping_ref(x, *, L=5, pos_scale=0.01, heading_scale=1.0):
    """Pure-JAX reference mirroring the PyTorch forward pass (exact sin/cos)."""
    if L == 0:
        return x
    D = x.shape[-1]
    split = (2 * D) // 3
    scale = jnp.concatenate(
        [jnp.full((split,), pos_scale, x.dtype),
         jnp.full((D - split,), heading_scale, x.dtype)]
    )
    x_scaled = x * scale
    parts = [x]
    for i in range(L):
        arg = (2.0 ** i) * PI * x_scaled
        parts.append(jnp.sin(arg) / scale)
        parts.append(jnp.cos(arg) / scale)
    return jnp.concatenate(parts, axis=-1)


if __name__ == "__main__":
    key = jax.random.PRNGKey(0)
    B, S, D = 2, 8, 6           # input_dim = 6 (2/3 pos coords, 1/3 heading)
    L = 5

    x = jax.random.normal(key, (B, S, D), dtype=jnp.float32)

    out = positional_mapping(x, L=L, pos_scale=0.01, heading_scale=1.0)
    out = jax.block_until_ready(out)

    ref = positional_mapping_ref(x, L=L, pos_scale=0.01, heading_scale=1.0)
    assert out.shape == (B, S, D * (2 * L + 1)), out.shape
    # Tolerance accounts for the double-angle recurrence drift (f32) vs. exact
    # per-frequency sin/cos; still far tighter than any real indexing/order bug.
    assert jnp.allclose(out, ref, atol=5e-4, rtol=5e-4), (
        "mismatch vs reference, max abs diff = %s" % jnp.max(jnp.abs(out - ref)))

    print("KERNEL_OK")
</pallas_src>

<mosaic_0001>
module attributes {stable_mosaic.version = 11 : i64} {
  func.func @_pos_mapping_kernel(%arg0: i32, %arg1: memref<6x128xf32, #tpu.memory_space<vmem>>, %arg2: memref<11x6x128xf32, #tpu.memory_space<vmem>>) attributes {dimension_semantics = [#tpu.dimension_semantics<parallel>], iteration_bounds = array<i64: 1>, scalar_prefetch = 0 : i64, scratch_operands = 0 : i64, tpu.core_type = #tpu.core_type<tc>, window_params = [{transform_indices = @transform_0, window_bounds = array<i64: 6, 128>}, {transform_indices = @transform_1, window_bounds = array<i64: 11, 6, 128>}]} {
    %c0 = arith.constant 0 : index
    %c0_0 = arith.constant 0 : index
    %0 = vector.load %arg1[%c0, %c0_0] : memref<6x128xf32, #tpu.memory_space<vmem>>, vector<6x128xf32>
    %1 = tpu.iota {dimensions = array<i32: 0>} : vector<6x1xi32>
    %c4_i32 = arith.constant 4 : i32
    %2 = vector.broadcast %c4_i32 : i32 to vector<6x1xi32>
    %3 = arith.cmpi slt, %1, %2 : vector<6x1xi32>
    %cst = arith.constant 0.00999999977 : f32
    %cst_1 = arith.constant 1.000000e+00 : f32
    %4 = vector.broadcast %cst : f32 to vector<6x1xf32>
    %5 = vector.broadcast %cst_1 : f32 to vector<6x1xf32>
    %6 = arith.select %3, %4, %5 : vector<6x1xi1>, vector<6x1xf32>
    %cst_2 = arith.constant 1.000000e+02 : f32
    %cst_3 = arith.constant 1.000000e+00 : f32
    %7 = vector.broadcast %cst_2 : f32 to vector<6x1xf32>
    %8 = vector.broadcast %cst_3 : f32 to vector<6x1xf32>
    %9 = arith.select %3, %7, %8 : vector<6x1xi1>, vector<6x1xf32>
    %c0_4 = arith.constant 0 : index
    %c0_5 = arith.constant 0 : index
    %c0_6 = arith.constant 0 : index
    %10 = vector.load %arg2[%c0_4, %c0_5, %c0_6] : memref<11x6x128xf32, #tpu.memory_space<vmem>>, vector<1x6x128xf32>
    %11 = vector.shape_cast %10 : vector<1x6x128xf32> to vector<6x128xf32>
    %12 = vector.shape_cast %0 : vector<6x128xf32> to vector<1x6x128xf32>
    tpu.vector_store %arg2[%c0_4, %c0_5, %c0_6], %12 {strides = array<i32>} : memref<11x6x128xf32, #tpu.memory_space<vmem>>, vector<1x6x128xf32>,
    %13 = vector.broadcast %6 : vector<6x1xf32> to vector<6x128xf32>
    %14 = arith.mulf %0, %13 : vector<6x128xf32>
    %cst_7 = arith.constant 3.14159274 : f32
    %15 = vector.broadcast %cst_7 : f32 to vector<6x128xf32>
    %16 = arith.mulf %15, %14 : vector<6x128xf32>
    %17 = math.sin %16 : vector<6x128xf32>
    %18 = math.cos %16 : vector<6x128xf32>
    %19 = vector.broadcast %9 : vector<6x1xf32> to vector<6x128xf32>
    %20 = arith.mulf %17, %19 : vector<6x128xf32>
    %c1 = arith.constant 1 : index
    %c0_8 = arith.constant 0 : index
    %c0_9 = arith.constant 0 : index
    %21 = vector.load %arg2[%c1, %c0_8, %c0_9] : memref<11x6x128xf32, #tpu.memory_space<vmem>>, vector<1x6x128xf32>
    %22 = vector.shape_cast %21 : vector<1x6x128xf32> to vector<6x128xf32>
    %23 = vector.shape_cast %20 : vector<6x128xf32> to vector<1x6x128xf32>
    tpu.vector_store %arg2[%c1, %c0_8, %c0_9], %23 {strides = array<i32>} : memref<11x6x128xf32, #tpu.memory_space<vmem>>, vector<1x6x128xf32>,
    %24 = vector.broadcast %9 : vector<6x1xf32> to vector<6x128xf32>
    %25 = arith.mulf %18, %24 : vector<6x128xf32>
    %c2 = arith.constant 2 : index
    %c0_10 = arith.constant 0 : index
    %c0_11 = arith.constant 0 : index
    %26 = vector.load %arg2[%c2, %c0_10, %c0_11] : memref<11x6x128xf32, #tpu.memory_space<vmem>>, vector<1x6x128xf32>
    %27 = vector.shape_cast %26 : vector<1x6x128xf32> to vector<6x128xf32>
    %28 = vector.shape_cast %25 : vector<6x128xf32> to vector<1x6x128xf32>
    tpu.vector_store %arg2[%c2, %c0_10, %c0_11], %28 {strides = array<i32>} : memref<11x6x128xf32, #tpu.memory_space<vmem>>, vector<1x6x128xf32>,
    %29 = arith.mulf %17, %18 : vector<6x128xf32>
    %cst_12 = arith.constant 2.000000e+00 : f32
    %30 = vector.broadcast %cst_12 : f32 to vector<6x128xf32>
    %31 = arith.mulf %30, %29 : vector<6x128xf32>
    %32 = arith.subf %18, %17 : vector<6x128xf32>
    %33 = arith.addf %18, %17 : vector<6x128xf32>
    %34 = arith.mulf %32, %33 : vector<6x128xf32>
    %35 = vector.broadcast %9 : vector<6x1xf32> to vector<6x128xf32>
    %36 = arith.mulf %31, %35 : vector<6x128xf32>
    %c3 = arith.constant 3 : index
    %c0_13 = arith.constant 0 : index
    %c0_14 = arith.constant 0 : index
    %37 = vector.load %arg2[%c3, %c0_13, %c0_14] : memref<11x6x128xf32, #tpu.memory_space<vmem>>, vector<1x6x128xf32>
    %38 = vector.shape_cast %37 : vector<1x6x128xf32> to vector<6x128xf32>
    %39 = vector.shape_cast %36 : vector<6x128xf32> to vector<1x6x128xf32>
    tpu.vector_store %arg2[%c3, %c0_13, %c0_14], %39 {strides = array<i32>} : memref<11x6x128xf32, #tpu.memory_space<vmem>>, vector<1x6x128xf32>,
    %40 = vector.broadcast %9 : vector<6x1xf32> to vector<6x128xf32>
    %41 = arith.mulf %34, %40 : vector<6x128xf32>
    %c4 = arith.constant 4 : index
    %c0_15 = arith.constant 0 : index
    %c0_16 = arith.constant 0 : index
    %42 = vector.load %arg2[%c4, %c0_15, %c0_16] : memref<11x6x128xf32, #tpu.memory_space<vmem>>, vector<1x6x128xf32>
    %43 = vector.shape_cast %42 : vector<1x6x128xf32> to vector<6x128xf32>
    %44 = vector.shape_cast %41 : vector<6x128xf32> to vector<1x6x128xf32>
    tpu.vector_store %arg2[%c4, %c0_15, %c0_16], %44 {strides = array<i32>} : memref<11x6x128xf32, #tpu.memory_space<vmem>>, vector<1x6x128xf32>,
    %45 = arith.mulf %31, %34 : vector<6x128xf32>
    %cst_17 = arith.constant 2.000000e+00 : f32
    %46 = vector.broadcast %cst_17 : f32 to vector<6x128xf32>
    %47 = arith.mulf %46, %45 : vector<6x128xf32>
    %48 = arith.subf %34, %31 : vector<6x128xf32>
    %49 = arith.addf %34, %31 : vector<6x128xf32>
    %50 = arith.mulf %48, %49 : vector<6x128xf32>
    %51 = vector.broadcast %9 : vector<6x1xf32> to vector<6x128xf32>
    %52 = arith.mulf %47, %51 : vector<6x128xf32>
    %c5 = arith.constant 5 : index
    %c0_18 = arith.constant 0 : index
    %c0_19 = arith.constant 0 : index
    %53 = vector.load %arg2[%c5, %c0_18, %c0_19] : memref<11x6x128xf32, #tpu.memory_space<vmem>>, vector<1x6x128xf32>
    %54 = vector.shape_cast %53 : vector<1x6x128xf32> to vector<6x128xf32>
    %55 = vector.shape_cast %52 : vector<6x128xf32> to vector<1x6x128xf32>
    tpu.vector_store %arg2[%c5, %c0_18, %c0_19], %55 {strides = array<i32>} : memref<11x6x128xf32, #tpu.memory_space<vmem>>, vector<1x6x128xf32>,
    %56 = vector.broadcast %9 : vector<6x1xf32> to vector<6x128xf32>
    %57 = arith.mulf %50, %56 : vector<6x128xf32>
    %c6 = arith.constant 6 : index
    %c0_20 = arith.constant 0 : index
    %c0_21 = arith.constant 0 : index
    %58 = vector.load %arg2[%c6, %c0_20, %c0_21] : memref<11x6x128xf32, #tpu.memory_space<vmem>>, vector<1x6x128xf32>
    %59 = vector.shape_cast %58 : vector<1x6x128xf32> to vector<6x128xf32>
    %60 = vector.shape_cast %57 : vector<6x128xf32> to vector<1x6x128xf32>
    tpu.vector_store %arg2[%c6, %c0_20, %c0_21], %60 {strides = array<i32>} : memref<11x6x128xf32, #tpu.memory_space<vmem>>, vector<1x6x128xf32>,
    %61 = arith.mulf %47, %50 : vector<6x128xf32>
    %cst_22 = arith.constant 2.000000e+00 : f32
    %62 = vector.broadcast %cst_22 : f32 to vector<6x128xf32>
    %63 = arith.mulf %62, %61 : vector<6x128xf32>
    %64 = arith.subf %50, %47 : vector<6x128xf32>
    %65 = arith.addf %50, %47 : vector<6x128xf32>
    %66 = arith.mulf %64, %65 : vector<6x128xf32>
    %67 = vector.broadcast %9 : vector<6x1xf32> to vector<6x128xf32>
    %68 = arith.mulf %63, %67 : vector<6x128xf32>
    %c7 = arith.constant 7 : index
    %c0_23 = arith.constant 0 : index
    %c0_24 = arith.constant 0 : index
    %69 = vector.load %arg2[%c7, %c0_23, %c0_24] : memref<11x6x128xf32, #tpu.memory_space<vmem>>, vector<1x6x128xf32>
    %70 = vector.shape_cast %69 : vector<1x6x128xf32> to vector<6x128xf32>
    %71 = vector.shape_cast %68 : vector<6x128xf32> to vector<1x6x128xf32>
    tpu.vector_store %arg2[%c7, %c0_23, %c0_24], %71 {strides = array<i32>} : memref<11x6x128xf32, #tpu.memory_space<vmem>>, vector<1x6x128xf32>,
    %72 = vector.broadcast %9 : vector<6x1xf32> to vector<6x128xf32>
    %73 = arith.mulf %66, %72 : vector<6x128xf32>
    %c8 = arith.constant 8 : index
    %c0_25 = arith.constant 0 : index
    %c0_26 = arith.constant 0 : index
    %74 = vector.load %arg2[%c8, %c0_25, %c0_26] : memref<11x6x128xf32, #tpu.memory_space<vmem>>, vector<1x6x128xf32>
    %75 = vector.shape_cast %74 : vector<1x6x128xf32> to vector<6x128xf32>
    %76 = vector.shape_cast %73 : vector<6x128xf32> to vector<1x6x128xf32>
    tpu.vector_store %arg2[%c8, %c0_25, %c0_26], %76 {strides = array<i32>} : memref<11x6x128xf32, #tpu.memory_space<vmem>>, vector<1x6x128xf32>,
    %77 = arith.mulf %63, %66 : vector<6x128xf32>
    %cst_27 = arith.constant 2.000000e+00 : f32
    %78 = vector.broadcast %cst_27 : f32 to vector<6x128xf32>
    %79 = arith.mulf %78, %77 : vector<6x128xf32>
    %80 = arith.subf %66, %63 : vector<6x128xf32>
    %81 = arith.addf %66, %63 : vector<6x128xf32>
    %82 = arith.mulf %80, %81 : vector<6x128xf32>
    %83 = vector.broadcast %9 : vector<6x1xf32> to vector<6x128xf32>
    %84 = arith.mulf %79, %83 : vector<6x128xf32>
    %c9 = arith.constant 9 : index
    %c0_28 = arith.constant 0 : index
    %c0_29 = arith.constant 0 : index
    %85 = vector.load %arg2[%c9, %c0_28, %c0_29] : memref<11x6x128xf32, #tpu.memory_space<vmem>>, vector<1x6x128xf32>
    %86 = vector.shape_cast %85 : vector<1x6x128xf32> to vector<6x128xf32>
    %87 = vector.shape_cast %84 : vector<6x128xf32> to vector<1x6x128xf32>
    tpu.vector_store %arg2[%c9, %c0_28, %c0_29], %87 {strides = array<i32>} : memref<11x6x128xf32, #tpu.memory_space<vmem>>, vector<1x6x128xf32>,
    %88 = vector.broadcast %9 : vector<6x1xf32> to vector<6x128xf32>
    %89 = arith.mulf %82, %88 : vector<6x128xf32>
    %c10 = arith.constant 10 : index
    %c0_30 = arith.constant 0 : index
    %c0_31 = arith.constant 0 : index
    %90 = vector.load %arg2[%c10, %c0_30, %c0_31] : memref<11x6x128xf32, #tpu.memory_space<vmem>>, vector<1x6x128xf32>
    %91 = vector.shape_cast %90 : vector<1x6x128xf32> to vector<6x128xf32>
    %92 = vector.shape_cast %89 : vector<6x128xf32> to vector<1x6x128xf32>
    tpu.vector_store %arg2[%c10, %c0_30, %c0_31], %92 {strides = array<i32>} : memref<11x6x128xf32, #tpu.memory_space<vmem>>, vector<1x6x128xf32>,
    return
  }
  func.func @transform_0(%arg0: i32) -> (i32, i32) {
    %c0_i32 = arith.constant 0 : i32
    %c0_i32_0 = arith.constant 0 : i32
    return %c0_i32, %arg0 : i32, i32
  }
  func.func @transform_1(%arg0: i32) -> (i32, i32, i32) {
    %c0_i32 = arith.constant 0 : i32
    %c0_i32_0 = arith.constant 0 : i32
    %c0_i32_1 = arith.constant 0 : i32
    return %c0_i32, %c0_i32_0, %arg0 : i32, i32, i32
  }
}

</mosaic_0001>

<llo_original>
// kernel: tpu_custom_call.1
$region0: #{tpu_custom_call.1}
  #allocation0 [shape = 'u32[]', space=smem, size = 0x4, offset = 0x4, fixed_abs, tag = 'smem constant byte address 0x4 - core index']
  #allocation1 [shape = 'u32[144,128]{1,0:T(1,128)}', space=vmem, size = 0x12000, scoped, tag = 'internal scratch']
  %s0 = inlined_call_operand.hbm [shape: f32[6,128], index: 0, kind: input, shape index: {}]
  %s1 = inlined_call_operand.hbm [shape: f32[11,6,128], index: 1, kind: output, shape index: {}]
  %s2 = sld [smem:[#allocation0]]
  $region18: #{tpu_custom_call.1} parent=0
    _
  %s4 = ssub.s32 1, %s2
  %s5 = scalar_select 0, %s4, %s2
  $region1: #{tpu_custom_call.1} parent=0
    #allocation2 [shape = 'u8[4096]{0}', space=vmem, size = 0x1000, scoped, tag = 'input window, operand 0, single buffered']
    #allocation3 [shape = 's32[1]{0}', space=sflag, size = 0x4, scoped, tag = 'scoped memory for tpu_custom_call.1']
    #allocation4 [shape = 's32[1]{0}', space=sflag, size = 0x4, scoped, tag = 'scoped memory for tpu_custom_call.1']
    #allocation5 [shape = 'u8[45056]{0}', space=vmem, size = 0xb000, scoped, tag = 'output window, operand 0, single buffered']
    %6 = vsyncpa [#allocation3], 0
    %7 = vsyncpa [#allocation4], 0
    // Predicated region
    $region2: #{tpu_custom_call.1} parent=1 // pred_check
      _
    $region3: #{tpu_custom_call.1} parent=1 // pred_check_branch
      %9 = sbr.rel (0) target = $region5
    $region4: #{tpu_custom_call.1} parent=1 // pred_region
      %s11 = ssub.s32 128, 128
      %12 = vsyncadd [#allocation3], %s11
      %s14 = sshll.u32 [#allocation2], 4
      %s15 = int_to_ptr.vmem [resolvable:$true] %s14
      %17 = dma.hbm_to_vmem [thread:$0]  %s0, 128, %s15, [#allocation3]
    $region5: #{tpu_custom_call.1} parent=1 // pred_fallthru
      _
    // Predicated region
    $region6: #{tpu_custom_call.1} parent=1 // pred_check
      _
    $region7: #{tpu_custom_call.1} parent=1 // pred_check_branch
      %19 = sbr.rel (0) target = $region9
    $region8: #{tpu_custom_call.1} parent=1 // pred_region
      %20 = dma.done [#allocation3], 128
    $region9: #{tpu_custom_call.1} parent=1 // pred_fallthru
      _
    %v21 = vld [vmem:[#allocation2] sm:$0x3f]
    %v22 = vlaneseq
    %v23 = vshrl.u32 %v22, 7
    %vm24 = vcmp.lt.s32.totalorder %v23, 4
    %v25 = vsel %vm24, 0.01, 1.0
    %v26 = vsel %vm24, 100.0, 1.0
    %27 = vst [vmem:[#allocation5] sm:$0x3f] %v21
    %v28 = vmul.f32 %v21, %v25
    %v29 = vmul.f32 %v28, 3.1415927
    %v30 = vand.u32 2147483647, %v29
    %vm31 = vcmp.le.f32.partialorder %v30, 0.7853982
    %vm32 = vcmp.lt.s32.totalorder %v29, 0
    %v33 = vand.u32 %v29, 2139095040
    %v34 = vshrl.u32 %v33, 23
    %v35 = vsub.s32 %v34, 127
    %v36 = vand.u32 2147483647, %v29
    %v37 = vand.u32 %v36, 8388607
    %v38 = vor.u32 %v37, 8388608
    %v39 = vsub.s32 0, %v38
    %v40 = vadd.s32 %v35, 1
    %vm41 = vcmp.gt.s32.totalorder %v40, 0
    %v42 = vsel %vm41, %v40, 0
    %v43 = vshrl.u32 %v42, 5
    %v44 = vand.u32 %v42, 31
    %v45 = vsub.s32 32, %v44
    %v46 = vshrl.u32 683565275, %v45
    %v47 = vshll.u32 683565275, %v44
    %v48 = vshrl.u32 2475754826, %v45
    %v49 = vor.u32 %v47, %v48
    %v50 = vshll.u32 2475754826, %v44
    %v51 = vshrl.u32 2131351028, %v45
    %v52 = vor.u32 %v50, %v51
    %v53 = vshll.u32 2131351028, %v44
    %v54 = vshrl.u32 2102212464, %v45
    %v55 = vor.u32 %v53, %v54
    %v56 = vshll.u32 2102212464, %v44
    %v57 = vshrl.u32 920167782, %v45
    %v58 = vor.u32 %v56, %v57
    %v59 = vshll.u32 920167782, %v44
    %v60 = vshrl.u32 1326507024, %v45
    %v61 = vor.u32 %v59, %v60
    %vm62 = vcmp.lt.s32.totalorder %v43, 1
    %vm63 = vcmp.lt.s32.totalorder %v43, 2
    %vm64 = vcmp.lt.s32.totalorder %v43, 3
    %vm65 = vcmp.lt.s32.totalorder %v43, 4
    %v66 = vsel %vm62, %v46, %v49
    %v67 = vsel %vm65, %v55, 2102212464
    %v68 = vsel %vm64, %v52, %v67
    %v69 = vsel %vm63, %v66, %v68
    %v70 = vsel %vm62, %v49, %v52
    %v71 = vsel %vm65, %v58, 920167782
    %v72 = vsel %vm64, %v55, %v71
    %v73 = vsel %vm63, %v70, %v72
    %v74 = vsel %vm62, %v52, %v55
    %v75 = vsel %vm65, %v61, 1326507024
    %v76 = vsel %vm64, %v58, %v75
    %v77 = vsel %vm63, %v74, %v76
    %v78 = vshll.u32 %v38, 8
    %v79 = vmul.u32.u64.compose %v78, %v77
    %v80 = vextract.low.u32 %v79
    %v81 = vextract.high.u32 %v79
    %v82 = vmul.u32.u64.compose %v78, %v73
    %v83 = vextract.low.u32 %v82
    %v84 = vextract.high.u32 %v82
    %v85 = vmul.u32 %v78, %v69
    %v86 = vadd.s32 %v81, %v83
    %vm87 = vc.u32 %v81, %v83
    %v88 = vadd.s32 %v84, 1
    %v89 = vsel %vm87, %v88, %v84
    %v90 = vadd.s32 %v85, %v89
    %v91 = vadd.s32 %v90, 536870912
    %v92 = vshrl.u32 %v91, 30
    %v93 = vshll.u32 %v92, 30
    %v94 = vsub.s32 %v90, %v93
    %vm95 = vcmp.lt.s32.totalorder %v94, 0
    %v96 = vsub.s32 0, %v94
    %v97 = vsel %vm95, %v96, %v94
    %v98 = vclz %v97
    %v99 = vsub.s32 %v98, 2
    %vm100 = vcmp.gt.s32.totalorder 0, %v99
    %v101 = vsel %vm100, 0, %v99
    %v102 = vsub.s32 32, %v101
    %v103 = vshll.u32 %v94, %v101
    %v104 = vshrl.u32 %v86, %v102
    %v105 = vor.u32 %v103, %v104
    %v106 = vsub.s32 4294967266, %v101
    %v107 = vadd.s32 %v106, 127
    %v108 = vshll.u32 %v107, 23
    %v109 = vor.u32 4788187, %v108
    %v110 = vand.u32 2147483647, %v109
    %v112 = vcvt.s32.f32 %v105
    %v113 = vmul.f32 %v112, %v110
    %v114 = vxor.u32 %v113, 2147483648
    %v115 = vsel %vm32, %v114, %v113
    %v116 = vsub.s32 4, %v92
    %v117 = vsel %vm32, %v116, %v92
    %v118 = vsel %vm31, %v29, %v115
    %v119 = vsel %vm31, 0, %v117
    %v120 = vcosq.f32.pop %v118
    %v121 = vsinq.f32.pop %v118
    %vm122 = vweird.f32 %v29
    %v123 = vadd.s32 %v119, 3
    %v124 = vand.u32 %v123, 3
    %vm125 = vcmp.lt.s32.totalorder %v124, 2
    %vm126 = vcmp.eq.s32.totalorder %v124, 0
    %v127 = vxor.u32 %v121, 2147483648
    %v128 = vsel %vm126, %v120, %v127
    %vm129 = vcmp.eq.s32.totalorder %v124, 2
    %v130 = vxor.u32 %v120, 2147483648
    %v131 = vsel %vm129, %v130, %v121
    %v132 = vsel %vm125, %v128, %v131
    %v133 = vsel %vm122, nan, %v132
    %v134 = vand.u32 2147483647, %v29
    %vm135 = vcmp.le.f32.partialorder %v134, 0.7853982
    %vm136 = vcmp.lt.s32.totalorder %v29, 0
    %v137 = vand.u32 %v29, 2139095040
    %v138 = vshrl.u32 %v137, 23
    %v139 = vsub.s32 %v138, 127
    %v140 = vand.u32 2147483647, %v29
    %v141 = vand.u32 %v140, 8388607
    %v142 = vor.u32 %v141, 8388608
    %v143 = vsub.s32 0, %v142
    %v144 = vadd.s32 %v139, 1
    %vm145 = vcmp.gt.s32.totalorder %v144, 0
    %v146 = vsel %vm145, %v144, 0
    %v147 = vshrl.u32 %v146, 5
    %v148 = vand.u32 %v146, 31
    %v149 = vsub.s32 32, %v148
    %v150 = vshrl.u32 683565275, %v149
    %v151 = vshll.u32 683565275, %v148
    %v152 = vshrl.u32 2475754826, %v149
    %v153 = vor.u32 %v151, %v152
    %v154 = vshll.u32 2475754826, %v148
    %v155 = vshrl.u32 2131351028, %v149
    %v156 = vor.u32 %v154, %v155
    %v157 = vshll.u32 2131351028, %v148
    %v158 = vshrl.u32 2102212464, %v149
    %v159 = vor.u32 %v157, %v158
    %v160 = vshll.u32 2102212464, %v148
    %v161 = vshrl.u32 920167782, %v149
    %v162 = vor.u32 %v160, %v161
    %v163 = vshll.u32 920167782, %v148
    %v164 = vshrl.u32 1326507024, %v149
    %v165 = vor.u32 %v163, %v164
    %vm166 = vcmp.lt.s32.totalorder %v147, 1
    %vm167 = vcmp.lt.s32.totalorder %v147, 2
    %vm168 = vcmp.lt.s32.totalorder %v147, 3
    %vm169 = vcmp.lt.s32.totalorder %v147, 4
    %v170 = vsel %vm166, %v150, %v153
    %v171 = vsel %vm169, %v159, 2102212464
    %v172 = vsel %vm168, %v156, %v171
    %v173 = vsel %vm167, %v170, %v172
    %v174 = vsel %vm166, %v153, %v156
    %v175 = vsel %vm169, %v162, 920167782
    %v176 = vsel %vm168, %v159, %v175
    %v177 = vsel %vm167, %v174, %v176
    %v178 = vsel %vm166, %v156, %v159
    %v179 = vsel %vm169, %v165, 1326507024
    %v180 = vsel %vm168, %v162, %v179
    %v181 = vsel %vm167, %v178, %v180
    %v182 = vshll.u32 %v142, 8
    %v183 = vmul.u32.u64.compose %v182, %v181
    %v184 = vextract.low.u32 %v183
    %v185 = vextract.high.u32 %v183
    %v186 = vmul.u32.u64.compose %v182, %v177
    %v187 = vextract.low.u32 %v186
    %v188 = vextract.high.u32 %v186
    %v189 = vmul.u32 %v182, %v173
    %v190 = vadd.s32 %v185, %v187
    %vm191 = vc.u32 %v185, %v187
    %v192 = vadd.s32 %v188, 1
    %v193 = vsel %vm191, %v192, %v188
    %v194 = vadd.s32 %v189, %v193
    %v195 = vadd.s32 %v194, 536870912
    %v196 = vshrl.u32 %v195, 30
    %v197 = vshll.u32 %v196, 30
    %v198 = vsub.s32 %v194, %v197
    %vm199 = vcmp.lt.s32.totalorder %v198, 0
    %v200 = vsub.s32 0, %v198
    %v201 = vsel %vm199, %v200, %v198
    %v202 = vclz %v201
    %v203 = vsub.s32 %v202, 2
    %vm204 = vcmp.gt.s32.totalorder 0, %v203
    %v205 = vsel %vm204, 0, %v203
    %v206 = vsub.s32 32, %v205
    %v207 = vshll.u32 %v198, %v205
    %v208 = vshrl.u32 %v190, %v206
    %v209 = vor.u32 %v207, %v208
    %v210 = vsub.s32 4294967266, %v205
    %v211 = vadd.s32 %v210, 127
    %v212 = vshll.u32 %v211, 23
    %v213 = vor.u32 4788187, %v212
    %v214 = vand.u32 2147483647, %v213
    %v216 = vcvt.s32.f32 %v209
    %v217 = vmul.f32 %v216, %v214
    %v218 = vxor.u32 %v217, 2147483648
    %v219 = vsel %vm136, %v218, %v217
    %v220 = vsub.s32 4, %v196
    %v221 = vsel %vm136, %v220, %v196
    %v222 = vsel %vm135, %v29, %v219
    %v223 = vsel %vm135, 0, %v221
    %v224 = vcosq.f32.pop %v222
    %v225 = vsinq.f32.pop %v222
    %vm226 = vweird.f32 %v29
    %v227 = vand.u32 %v223, 3
    %vm228 = vcmp.lt.s32.totalorder %v227, 2
    %vm229 = vcmp.eq.s32.totalorder %v227, 0
    %v230 = vxor.u32 %v225, 2147483648
    %v231 = vsel %vm229, %v224, %v230
    %vm232 = vcmp.eq.s32.totalorder %v227, 2
    %v233 = vxor.u32 %v224, 2147483648
    %v234 = vsel %vm232, %v233, %v225
    %v235 = vsel %vm228, %v231, %v234
    %v236 = vsel %vm226, nan, %v235
    %v237 = vmul.f32 %v133, %v26
    %s238 = scalar_lea.vmem [#allocation5], 8
    %239 = vst [vmem:[%s238] sm:$0x3f] %v237
    %v240 = vmul.f32 %v236, %v26
    %s241 = scalar_lea.vmem [#allocation5], 16
    %242 = vst [vmem:[%s241] sm:$0x3f] %v240
    %v243 = vmul.f32 %v133, %v236
    %v244 = vmul.f32 %v243, 2.0
    %v245 = vsub.f32 %v236, %v133
    %v246 = vadd.f32 %v236, %v133
    %v247 = vmul.f32 %v245, %v246
    %v248 = vmul.f32 %v244, %v26
    %s249 = scalar_lea.vmem [#allocation5], 24
    %250 = vst [vmem:[%s249] sm:$0x3f] %v248
    %v251 = vmul.f32 %v247, %v26
    %s252 = scalar_lea.vmem [#allocation5], 32
    %253 = vst [vmem:[%s252] sm:$0x3f] %v251
    %v254 = vmul.f32 %v244, %v247
    %v255 = vmul.f32 %v254, 2.0
    %v256 = vsub.f32 %v247, %v244
    %v257 = vadd.f32 %v247, %v244
    %v258 = vmul.f32 %v256, %v257
    %v259 = vmul.f32 %v255, %v26
    %s260 = scalar_lea.vmem [#allocation5], 40
    %261 = vst [vmem:[%s260] sm:$0x3f] %v259
    %v262 = vmul.f32 %v258, %v26
    %s263 = scalar_lea.vmem [#allocation5], 48
    %264 = vst [vmem:[%s263] sm:$0x3f] %v262
    %v265 = vmul.f32 %v255, %v258
    %v266 = vmul.f32 %v265, 2.0
    %v267 = vsub.f32 %v258, %v255
    %v268 = vadd.f32 %v258, %v255
    %v269 = vmul.f32 %v267, %v268
    %v270 = vmul.f32 %v266, %v26
    %s271 = scalar_lea.vmem [#allocation5], 56
    %272 = vst [vmem:[%s271] sm:$0x3f] %v270
    %v273 = vmul.f32 %v269, %v26
    %s274 = scalar_lea.vmem [#allocation5], 64
    %275 = vst [vmem:[%s274] sm:$0x3f] %v273
    %v276 = vmul.f32 %v266, %v269
    %v277 = vmul.f32 %v276, 2.0
    %v278 = vsub.f32 %v269, %v266
    %v279 = vadd.f32 %v269, %v266
    %v280 = vmul.f32 %v278, %v279
    %v281 = vmul.f32 %v277, %v26
    %s282 = scalar_lea.vmem [#allocation5], 72
    %283 = vst [vmem:[%s282] sm:$0x3f] %v281
    %v284 = vmul.f32 %v280, %v26
    %s285 = scalar_lea.vmem [#allocation5], 80
    %286 = vst [vmem:[%s285] sm:$0x3f] %v284
    // Predicated region
    $region10: #{tpu_custom_call.1} parent=1 // pred_check
      _
    $region11: #{tpu_custom_call.1} parent=1 // pred_check_branch
      %288 = sbr.rel (0) target = $region13
    $region12: #{tpu_custom_call.1} parent=1 // pred_region
      %s290 = ssub.s32 1408, 1408
      %291 = vsyncadd [#allocation4], %s290
      %s292 = sshll.u32 [#allocation5], 4
      %s293 = int_to_ptr.vmem [resolvable:$true] %s292
      %298 = dma.vmem_to_hbm [thread:$0]  %s293, 1408, %s1, [#allocation4], 128, 128, 8
    $region13: #{tpu_custom_call.1} parent=1 // pred_fallthru
      _
    // Predicated region
    $region14: #{tpu_custom_call.1} parent=1 // pred_check
      _
    $region15: #{tpu_custom_call.1} parent=1 // pred_check_branch
      %300 = sbr.rel (0) target = $region17
    $region16: #{tpu_custom_call.1} parent=1 // pred_region
      %301 = dma.done [#allocation4], 1408
    $region17: #{tpu_custom_call.1} parent=1 // pred_fallthru
      _
    %302 = vsyncpa [#allocation3], 1
    %303 = vsyncpa [#allocation4], 1

</llo_original>
